<compile_context>
chip_gen: v5e
topology: v5e:2x2
jax: 0.10.0
libtpu: 0.0.40
codegen_flags: <defaults>
</compile_context>

<pallas_src>
import jax
import jax.numpy as jnp
from jax.experimental import pallas as pl
from jax.experimental.pallas import tpu as pltpu


# ----------------------------- add policy -----------------------------------
def _add_kernel(*refs):
    # refs = (in_0, ..., in_{k-1}, out)
    in_refs, out_ref = refs[:-1], refs[-1]
    dt = in_refs[0].dtype
    # f32 accumulation for low-precision floats; costs nothing (HBM-bound op).
    acc_dt = jnp.float32 if jnp.issubdtype(dt, jnp.floating) else dt
    acc = in_refs[0][...].astype(acc_dt)
    for r in in_refs[1:]:
        acc = acc + r[...].astype(acc_dt)
    out_ref[...] = acc.astype(out_ref.dtype)


def _pick_lane(total):
    """Largest lane width (multiple of 128) dividing `total`, preferring one
    that still leaves >= 8 rows for sublane utilization."""
    best = None
    for lane in (2048, 1024, 512, 256, 128):
        if total % lane == 0:
            if best is None:
                best = lane
            if total // lane >= 8:
                return lane
    return best


def merge_add(xs):
    shape = xs[0].shape
    dtype = xs[0].dtype
    for x in xs:
        assert x.shape == shape and x.dtype == dtype
    n, c, h, w = shape
    total = n * c * h * w
    lane = _pick_lane(total)

    if lane is None:
        # Awkward size (not a multiple of 128): fall back to (N*C, H*W) with a
        # single full-array block (valid per the tiling rule).
        rows, lane = n * c, h * w
        xs2 = [x.reshape(rows, lane) for x in xs]
        spec = pl.BlockSpec((rows, lane), lambda: (0, 0))
        out2 = pl.pallas_call(
            _add_kernel,
            out_shape=jax.ShapeDtypeStruct((rows, lane), dtype),
            in_specs=[spec] * len(xs2),
            out_specs=spec,
        )(*xs2)
        return out2.reshape(shape)

    rows = total // lane
    xs2 = [x.reshape(rows, lane) for x in xs]

    # Tile the row dim so that the double-buffered pipeline (K inputs + 1
    # output, 2 buffers each) stays under ~8 MiB -> safe on v5e's 16 MiB
    # scoped default and v7x's smaller VMEM.
    n_bufs = 2 * (len(xs) + 1)
    itemsize = jnp.dtype(dtype).itemsize
    budget = 8 * 1024 * 1024
    max_rows = budget // (n_bufs * lane * itemsize)
    max_rows = max(8, (max_rows // 8) * 8)

    if rows <= max_rows:
        tile_rows = rows            # single block == full dims (valid tiling)
        grid = (1,)
    else:
        tile_rows = min(max_rows, 1024)   # multiple of 8
        grid = (pl.cdiv(rows, tile_rows),)

    spec = pl.BlockSpec((tile_rows, lane), lambda i: (i, 0))
    out2 = pl.pallas_call(
        _add_kernel,
        out_shape=jax.ShapeDtypeStruct((rows, lane), dtype),
        grid=grid,
        in_specs=[spec] * len(xs2),
        out_specs=spec,
        compiler_params=pltpu.CompilerParams(
            dimension_semantics=("parallel",)),
    )(*xs2)
    return out2.reshape(shape)


# ----------------------------- cat policy ------------------------------------
def _make_cat_dma_kernel(channels):
    num_in = len(channels)

    def _cat_kernel(*refs):
        in_refs = refs[:num_in]          # HBM refs (memory_space=pl.ANY)
        out_ref = refs[num_in]           # HBM ref
        sems = refs[num_in + 1]          # DMA semaphore array, shape (num_in,)
        copies = []
        off = 0
        for i, (r, ch) in enumerate(zip(in_refs, channels)):
            # Direct HBM -> HBM slab copy into the channel offset of the
            # output; never touches vregs / VMEM.
            cp = pltpu.make_async_copy(
                r, out_ref.at[:, off:off + ch, :], sems.at[i])
            cp.start()
            copies.append(cp)
            off += ch
        for cp in copies:
            cp.wait()

    return _cat_kernel


def merge_cat(xs):
    dtype = xs[0].dtype
    n, _, h, w = xs[0].shape
    channels = tuple(x.shape[1] for x in xs)
    for x in xs:
        assert x.shape[0] == n and x.shape[2] == h and x.shape[3] == w
        assert x.dtype == dtype
    c_total = sum(channels)
    hw = h * w

    # Lane-dense layout: (N, C_i, H*W); concat axis stays dim 1.
    xs3 = [x.reshape(n, ch, hw) for x, ch in zip(xs, channels)]

    out3 = pl.pallas_call(
        _make_cat_dma_kernel(channels),
        out_shape=jax.ShapeDtypeStruct((n, c_total, hw), dtype),
        in_specs=[pl.BlockSpec(memory_space=pl.ANY)] * len(xs3),
        out_specs=pl.BlockSpec(memory_space=pl.ANY),
        scratch_shapes=[pltpu.SemaphoreType.DMA((len(xs3),))],
    )(*xs3)
    return out3.reshape(n, c_total, h, w)


# ----------------------------- module wrapper --------------------------------
def merge_block(xs, policy):
    if policy == "add":
        return merge_add(xs)
    elif policy == "cat":
        return merge_cat(xs)
    else:
        raise ValueError(
            "`merge_policy` must be one of: ['add', 'cat'], got {}".format(policy)
        )


if __name__ == "__main__":
    key = jax.random.PRNGKey(0)
    num_inputs = 4
    N, C, H, W = 2, 4, 16, 16
    keys = jax.random.split(key, num_inputs)
    xs = [jax.random.normal(k, (N, C, H, W), dtype=jnp.float32) for k in keys]

    # add policy
    out_add = merge_block(xs, "add")
    jax.block_until_ready(out_add)
    ref_add = sum(xs)
    assert out_add.shape == (N, C, H, W)
    assert jnp.allclose(out_add, ref_add, atol=1e-6), "add mismatch"

    # cat policy
    out_cat = merge_block(xs, "cat")
    jax.block_until_ready(out_cat)
    ref_cat = jnp.concatenate(xs, axis=1)
    assert out_cat.shape == (N, C * num_inputs, H, W)
    assert jnp.array_equal(out_cat, ref_cat), "cat mismatch"

    print("KERNEL_OK")
</pallas_src>

<mosaic_0001>
module attributes {stable_mosaic.version = 11 : i64} {
  func.func @_add_kernel(%arg0: i32, %arg1: memref<8x256xf32, #tpu.memory_space<vmem>>, %arg2: memref<8x256xf32, #tpu.memory_space<vmem>>, %arg3: memref<8x256xf32, #tpu.memory_space<vmem>>, %arg4: memref<8x256xf32, #tpu.memory_space<vmem>>, %arg5: memref<8x256xf32, #tpu.memory_space<vmem>>) attributes {dimension_semantics = [#tpu.dimension_semantics<parallel>], iteration_bounds = array<i64: 1>, scalar_prefetch = 0 : i64, scratch_operands = 0 : i64, tpu.core_type = #tpu.core_type<tc>, window_params = [{transform_indices = @transform_0, window_bounds = array<i64: 8, 256>}, {transform_indices = @transform_1, window_bounds = array<i64: 8, 256>}, {transform_indices = @transform_2, window_bounds = array<i64: 8, 256>}, {transform_indices = @transform_3, window_bounds = array<i64: 8, 256>}, {transform_indices = @transform_4, window_bounds = array<i64: 8, 256>}]} {
    %c0 = arith.constant 0 : index
    %c0_0 = arith.constant 0 : index
    %0 = vector.load %arg1[%c0, %c0_0] : memref<8x256xf32, #tpu.memory_space<vmem>>, vector<8x256xf32>
    %c0_1 = arith.constant 0 : index
    %c0_2 = arith.constant 0 : index
    %1 = vector.load %arg2[%c0_1, %c0_2] : memref<8x256xf32, #tpu.memory_space<vmem>>, vector<8x256xf32>
    %2 = arith.addf %0, %1 : vector<8x256xf32>
    %c0_3 = arith.constant 0 : index
    %c0_4 = arith.constant 0 : index
    %3 = vector.load %arg3[%c0_3, %c0_4] : memref<8x256xf32, #tpu.memory_space<vmem>>, vector<8x256xf32>
    %4 = arith.addf %2, %3 : vector<8x256xf32>
    %c0_5 = arith.constant 0 : index
    %c0_6 = arith.constant 0 : index
    %5 = vector.load %arg4[%c0_5, %c0_6] : memref<8x256xf32, #tpu.memory_space<vmem>>, vector<8x256xf32>
    %6 = arith.addf %4, %5 : vector<8x256xf32>
    %c0_7 = arith.constant 0 : index
    %c0_8 = arith.constant 0 : index
    %7 = vector.load %arg5[%c0_7, %c0_8] : memref<8x256xf32, #tpu.memory_space<vmem>>, vector<8x256xf32>
    tpu.vector_store %arg5[%c0_7, %c0_8], %6 {strides = array<i32>} : memref<8x256xf32, #tpu.memory_space<vmem>>, vector<8x256xf32>,
    return
  }
  func.func @transform_0(%arg0: i32) -> (i32, i32) {
    %c0_i32 = arith.constant 0 : i32
    %c0_i32_0 = arith.constant 0 : i32
    return %arg0, %c0_i32 : i32, i32
  }
  func.func @transform_1(%arg0: i32) -> (i32, i32) {
    %c0_i32 = arith.constant 0 : i32
    %c0_i32_0 = arith.constant 0 : i32
    return %arg0, %c0_i32 : i32, i32
  }
  func.func @transform_2(%arg0: i32) -> (i32, i32) {
    %c0_i32 = arith.constant 0 : i32
    %c0_i32_0 = arith.constant 0 : i32
    return %arg0, %c0_i32 : i32, i32
  }
  func.func @transform_3(%arg0: i32) -> (i32, i32) {
    %c0_i32 = arith.constant 0 : i32
    %c0_i32_0 = arith.constant 0 : i32
    return %arg0, %c0_i32 : i32, i32
  }
  func.func @transform_4(%arg0: i32) -> (i32, i32) {
    %c0_i32 = arith.constant 0 : i32
    %c0_i32_0 = arith.constant 0 : i32
    return %arg0, %c0_i32 : i32, i32
  }
}

</mosaic_0001>

<llo_original>
// kernel: tpu_custom_call.1
$region0: #{tpu_custom_call.1}
  #allocation0 [shape = 'u32[]', space=smem, size = 0x4, offset = 0x4, fixed_abs, tag = 'smem constant byte address 0x4 - core index']
  #allocation1 [shape = 'u32[72,128]{1,0:T(1,128)}', space=vmem, size = 0x9000, scoped, tag = 'internal scratch']
  %s0 = inlined_call_operand.hbm [shape: f32[8,256], index: 0, kind: input, shape index: {}]
  %s1 = inlined_call_operand.hbm [shape: f32[8,256], index: 1, kind: input, shape index: {}]
  %s2 = inlined_call_operand.hbm [shape: f32[8,256], index: 2, kind: input, shape index: {}]
  %s3 = inlined_call_operand.hbm [shape: f32[8,256], index: 3, kind: input, shape index: {}]
  %s4 = inlined_call_operand.hbm [shape: f32[8,256], index: 4, kind: output, shape index: {}]
  %s5 = sld [smem:[#allocation0]]
  $region42: #{tpu_custom_call.1} parent=0
    _
  %s7 = ssub.s32 1, %s5
  %s8 = scalar_select 0, %s7, %s5
  $region1: #{tpu_custom_call.1} parent=0
    #allocation2 [shape = 'u8[8192]{0}', space=vmem, size = 0x2000, scoped, tag = 'input window, operand 0, single buffered']
    #allocation3 [shape = 's32[1]{0}', space=sflag, size = 0x4, scoped, tag = 'scoped memory for tpu_custom_call.1']
    #allocation4 [shape = 's32[1]{0}', space=sflag, size = 0x4, scoped, tag = 'scoped memory for tpu_custom_call.1']
    #allocation5 [shape = 'u8[8192]{0}', space=vmem, size = 0x2000, scoped, tag = 'input window, operand 1, single buffered']
    #allocation6 [shape = 's32[1]{0}', space=sflag, size = 0x4, scoped, tag = 'scoped memory for tpu_custom_call.1']
    #allocation7 [shape = 'u8[8192]{0}', space=vmem, size = 0x2000, scoped, tag = 'input window, operand 2, single buffered']
    #allocation8 [shape = 'u8[8192]{0}', space=vmem, size = 0x2000, scoped, tag = 'input window, operand 3, single buffered']
    #allocation9 [shape = 's32[1]{0}', space=sflag, size = 0x4, scoped, tag = 'scoped memory for tpu_custom_call.1']
    #allocation10 [shape = 'u8[8192]{0}', space=vmem, size = 0x2000, scoped, tag = 'output window, operand 0, single buffered']
    %9 = vsyncpa [#allocation3], 0
    %10 = vsyncpa [#allocation6], 0
    %11 = vsyncpa [#allocation9], 0
    %12 = vsyncpa [#allocation4], 0
    // Predicated region
    $region2: #{tpu_custom_call.1} parent=1 // pred_check
      _
    $region3: #{tpu_custom_call.1} parent=1 // pred_check_branch
      %14 = sbr.rel (0) target = $region5
    $region4: #{tpu_custom_call.1} parent=1 // pred_region
      %16 = vsyncadd [#allocation3], 0
      %s18 = sshll.u32 %s0, 4
      %s19 = int_to_ptr.hbm [resolvable:$true] %s18
      %s20 = sshll.u32 [#allocation2], 4
      %s21 = int_to_ptr.vmem [resolvable:$true] %s20
      %23 = dma.hbm_to_vmem [thread:$0]  %s19, 256, %s21, [#allocation3]
    $region5: #{tpu_custom_call.1} parent=1 // pred_fallthru
      _
    // Predicated region
    $region6: #{tpu_custom_call.1} parent=1 // pred_check
      _
    $region7: #{tpu_custom_call.1} parent=1 // pred_check_branch
      %25 = sbr.rel (0) target = $region9
    $region8: #{tpu_custom_call.1} parent=1 // pred_region
      %27 = vsyncadd [#allocation6], 0
      %s29 = sshll.u32 %s1, 4
      %s30 = int_to_ptr.hbm [resolvable:$true] %s29
      %s31 = sshll.u32 [#allocation5], 4
      %s32 = int_to_ptr.vmem [resolvable:$true] %s31
      %34 = dma.hbm_to_vmem [thread:$0]  %s30, 256, %s32, [#allocation6]
    $region9: #{tpu_custom_call.1} parent=1 // pred_fallthru
      _
    // Predicated region
    $region10: #{tpu_custom_call.1} parent=1 // pred_check
      _
    $region11: #{tpu_custom_call.1} parent=1 // pred_check_branch
      %36 = sbr.rel (0) target = $region13
    $region12: #{tpu_custom_call.1} parent=1 // pred_region
      %38 = vsyncadd [#allocation6], 0
      %s40 = sshll.u32 %s2, 4
      %s41 = int_to_ptr.hbm [resolvable:$true] %s40
      %s42 = sshll.u32 [#allocation7], 4
      %s43 = int_to_ptr.vmem [resolvable:$true] %s42
      %45 = dma.hbm_to_vmem [thread:$0]  %s41, 256, %s43, [#allocation6]
    $region13: #{tpu_custom_call.1} parent=1 // pred_fallthru
      _
    // Predicated region
    $region14: #{tpu_custom_call.1} parent=1 // pred_check
      _
    $region15: #{tpu_custom_call.1} parent=1 // pred_check_branch
      %47 = sbr.rel (0) target = $region17
    $region16: #{tpu_custom_call.1} parent=1 // pred_region
      %49 = vsyncadd [#allocation9], 0
      %s51 = sshll.u32 %s3, 4
      %s52 = int_to_ptr.hbm [resolvable:$true] %s51
      %s53 = sshll.u32 [#allocation8], 4
      %s54 = int_to_ptr.vmem [resolvable:$true] %s53
      %56 = dma.hbm_to_vmem [thread:$0]  %s52, 256, %s54, [#allocation9]
    $region17: #{tpu_custom_call.1} parent=1 // pred_fallthru
      _
    // Predicated region
    $region18: #{tpu_custom_call.1} parent=1 // pred_check
      _
    $region19: #{tpu_custom_call.1} parent=1 // pred_check_branch
      %58 = sbr.rel (0) target = $region21
    $region20: #{tpu_custom_call.1} parent=1 // pred_region
      %60 = dma.done [#allocation3], 256
    $region21: #{tpu_custom_call.1} parent=1 // pred_fallthru
      _
    // Predicated region
    $region22: #{tpu_custom_call.1} parent=1 // pred_check
      _
    $region23: #{tpu_custom_call.1} parent=1 // pred_check_branch
      %62 = sbr.rel (0) target = $region25
    $region24: #{tpu_custom_call.1} parent=1 // pred_region
      %64 = dma.done [#allocation6], 256
    $region25: #{tpu_custom_call.1} parent=1 // pred_fallthru
      _
    // Predicated region
    $region26: #{tpu_custom_call.1} parent=1 // pred_check
      _
    $region27: #{tpu_custom_call.1} parent=1 // pred_check_branch
      %66 = sbr.rel (0) target = $region29
    $region28: #{tpu_custom_call.1} parent=1 // pred_region
      %68 = dma.done [#allocation6], 256
    $region29: #{tpu_custom_call.1} parent=1 // pred_fallthru
      _
    // Predicated region
    $region30: #{tpu_custom_call.1} parent=1 // pred_check
      _
    $region31: #{tpu_custom_call.1} parent=1 // pred_check_branch
      %70 = sbr.rel (0) target = $region33
    $region32: #{tpu_custom_call.1} parent=1 // pred_region
      %72 = dma.done [#allocation9], 256
    $region33: #{tpu_custom_call.1} parent=1 // pred_fallthru
      _
    %v73 = vld [vmem:[#allocation2] sm:$0xff]
    %v74 = vld [vmem:[#allocation2 + $0x8] sm:$0xff]
    %v75 = vld [vmem:[#allocation5] sm:$0xff]
    %v76 = vld [vmem:[#allocation5 + $0x8] sm:$0xff]
    %v77 = vadd.f32 %v73, %v75
    %v78 = vadd.f32 %v74, %v76
    %v79 = vld [vmem:[#allocation7] sm:$0xff]
    %v80 = vld [vmem:[#allocation7 + $0x8] sm:$0xff]
    %v81 = vadd.f32 %v77, %v79
    %v82 = vadd.f32 %v78, %v80
    %v83 = vld [vmem:[#allocation8] sm:$0xff]
    %v84 = vld [vmem:[#allocation8 + $0x8] sm:$0xff]
    %v85 = vadd.f32 %v81, %v83
    %v86 = vadd.f32 %v82, %v84
    %87 = vst [vmem:[#allocation10] sm:$0xff] %v85
    %88 = vst [vmem:[#allocation10 + $0x8] sm:$0xff] %v86
    // Predicated region
    $region34: #{tpu_custom_call.1} parent=1 // pred_check
      _
    $region35: #{tpu_custom_call.1} parent=1 // pred_check_branch
      %90 = sbr.rel (0) target = $region37
    $region36: #{tpu_custom_call.1} parent=1 // pred_region
      %92 = vsyncadd [#allocation4], 0
      %s94 = sshll.u32 [#allocation10], 4
      %s95 = int_to_ptr.vmem [resolvable:$true] %s94
      %s96 = sshll.u32 %s4, 4
      %s97 = int_to_ptr.hbm [resolvable:$true] %s96
      %99 = dma.vmem_to_hbm [thread:$0]  %s95, 256, %s97, [#allocation4]
    $region37: #{tpu_custom_call.1} parent=1 // pred_fallthru
      _
    // Predicated region
    $region38: #{tpu_custom_call.1} parent=1 // pred_check
      _
    $region39: #{tpu_custom_call.1} parent=1 // pred_check_branch
      %101 = sbr.rel (0) target = $region41
    $region40: #{tpu_custom_call.1} parent=1 // pred_region
      %103 = dma.done [#allocation4], 256
    $region41: #{tpu_custom_call.1} parent=1 // pred_fallthru
      _
    %104 = vsyncpa [#allocation3], 1
    %105 = vsyncpa [#allocation6], 1
    %106 = vsyncpa [#allocation9], 1
    %107 = vsyncpa [#allocation4], 1

</llo_original>
